<compile_context>
chip_gen: v7x
topology: tpu7x:2x2x1
jax: 0.10.0
libtpu: 0.0.40
codegen_flags: <defaults>
</compile_context>

<pallas_src>
import jax
import jax.numpy as jnp
from jax import lax
from jax.experimental import pallas as pl
from jax.experimental.pallas import tpu as pltpu

EMBED_DIM = 4
MLP_SIZE = 128
LN_EPS = 1e-5


def mlp_block_kernel(xT_ref, gamma_ref, beta_ref, w1T_ref, b1_ref, w2T_ref, b2_ref, oT_ref):
    # xT: (E, T)   gamma/beta: (E, 1)   w1T: (H, E)   b1: (H, 1)   w2T: (E, H)   b2: (E, 1)
    E = xT_ref.shape[0]

    xT = xT_ref[...].astype(jnp.float32)                        # (E, T)

    # LayerNorm over the embedding dim (axis 0), biased variance, eps=1e-5 (PyTorch defaults).
    mean = jnp.mean(xT, axis=0, keepdims=True)                  # (1, T)
    var = jnp.mean((xT - mean) ** 2, axis=0, keepdims=True)     # (1, T)
    xnT = (xT - mean) * lax.rsqrt(var + LN_EPS)
    xnT = xnT * gamma_ref[...] + beta_ref[...]                  # (E, 1) broadcast over lanes

    # Linear(E -> H): K = E = 4 is too skinny for the MXU; do E unrolled broadcast MACs (VPU).
    w1T = w1T_ref[...]                                          # (H, E)
    hT = b1_ref[...] + w1T[:, 0:1] * xnT[0:1, :]                # (H, T)
    for e in range(1, E):
        hT = hT + w1T[:, e:e + 1] * xnT[e:e + 1, :]

    # Exact (erf-based) GELU, matching torch.nn.GELU() default.
    hT = 0.5 * hT * (1.0 + lax.erf(hT * jnp.float32(0.7071067811865476)))

    # Dropout(p=0.1) -> identity in eval mode.

    # Linear(H -> E): full-depth K=128 MXU matmul; (E, T) result is lane-dense.
    yT = jnp.dot(w2T_ref[...], hT, preferred_element_type=jnp.float32) + b2_ref[...]

    # Dropout(p=0.1) -> identity in eval mode.
    oT_ref[...] = yT.astype(oT_ref.dtype)


def mlp_block(x, gamma, beta, w1, b1, w2, b2, *, tile_n=512):
    """x: (B, S, E) float32. Returns (B, S, E). Eval-mode MLPBlock forward."""
    B, S, E = x.shape
    H = w1.shape[1]
    N = B * S

    # Lane-dense transposed slab: (E, N), tokens along lanes.
    xT = x.reshape(N, E).T

    # Pad the token axis so every grid tile is full (no ragged tail / OOB accesses).
    n_lane = ((N + 127) // 128) * 128
    tile = min(tile_n, n_lane)
    n_pad = ((n_lane + tile - 1) // tile) * tile
    if n_pad != N:
        xT = jnp.pad(xT, ((0, 0), (0, n_pad - N)))
    num_tiles = n_pad // tile

    def const_spec(shape):
        # Full-array block, same block every grid step -> stays VMEM-resident.
        return pl.BlockSpec(shape, lambda i: (0, 0))

    outT = pl.pallas_call(
        mlp_block_kernel,
        out_shape=jax.ShapeDtypeStruct((E, n_pad), x.dtype),
        grid=(num_tiles,),
        in_specs=[
            pl.BlockSpec((E, tile), lambda i: (0, i)),   # x^T, streamed tile-by-tile
            const_spec((E, 1)),                          # gamma
            const_spec((E, 1)),                          # beta
            const_spec((H, E)),                          # w1^T
            const_spec((H, 1)),                          # b1
            const_spec((E, H)),                          # w2^T
            const_spec((E, 1)),                          # b2
        ],
        out_specs=pl.BlockSpec((E, tile), lambda i: (0, i)),
        compiler_params=pltpu.CompilerParams(
            dimension_semantics=("parallel",),           # shards across v7x's 2 TCs
            vmem_limit_bytes=32 * 1024 * 1024,           # explicit budget, safe on v5e/v6e/v7x
        ),
    )(
        xT,
        gamma.reshape(E, 1),
        beta.reshape(E, 1),
        w1.T,                  # (H, E)
        b1.reshape(H, 1),
        w2.T,                  # (E, H)
        b2.reshape(E, 1),
    )

    return outT[:, :N].T.reshape(B, S, E)


def mlp_block_ref(x, gamma, beta, w1, b1, w2, b2):
    """Pure-JAX reference (eval mode) for correctness checking."""
    mean = jnp.mean(x, axis=-1, keepdims=True)
    var = jnp.mean((x - mean) ** 2, axis=-1, keepdims=True)
    xn = (x - mean) * lax.rsqrt(var + LN_EPS) * gamma + beta
    h = xn @ w1 + b1
    h = 0.5 * h * (1.0 + lax.erf(h * jnp.float32(0.7071067811865476)))
    return h @ w2 + b2


def init_params(key, embed_dim=EMBED_DIM, mlp_size=MLP_SIZE):
    k1, k2, k3, k4 = jax.random.split(key, 4)
    # LayerNorm params (PyTorch init: gamma=1, beta=0)
    gamma = jnp.ones((embed_dim,), jnp.float32)
    beta = jnp.zeros((embed_dim,), jnp.float32)
    # Linear params (uniform in PyTorch's fan-in range); stored as (in, out) so y = x @ w + b.
    bound1 = 1.0 / jnp.sqrt(embed_dim)
    w1 = jax.random.uniform(k1, (embed_dim, mlp_size), jnp.float32, -bound1, bound1)
    b1 = jax.random.uniform(k2, (mlp_size,), jnp.float32, -bound1, bound1)
    bound2 = 1.0 / jnp.sqrt(mlp_size)
    w2 = jax.random.uniform(k3, (mlp_size, embed_dim), jnp.float32, -bound2, bound2)
    b2 = jax.random.uniform(k4, (embed_dim,), jnp.float32, -bound2, bound2)
    return gamma, beta, w1, b1, w2, b2


if __name__ == "__main__":
    key = jax.random.PRNGKey(0)
    kx, kp = jax.random.split(key)

    B, S, E = 2, 8, EMBED_DIM
    x = jax.random.normal(kx, (B, S, E), jnp.float32)
    gamma, beta, w1, b1, w2, b2 = init_params(kp)

    y = mlp_block(x, gamma, beta, w1, b1, w2, b2)
    jax.block_until_ready(y)

    assert y.shape == (B, S, E) and y.dtype == jnp.float32
    y_ref = mlp_block_ref(x, gamma, beta, w1, b1, w2, b2)
    assert bool(jnp.all(jnp.isfinite(y)))
    assert bool(jnp.allclose(y, y_ref, rtol=1e-3, atol=1e-3))
    print("KERNEL_OK")
</pallas_src>

<mosaic_0001>
module attributes {stable_mosaic.version = 11 : i64} {
  func.func @mlp_block_kernel(%arg0: i32, %arg1: memref<4x128xf32, #tpu.memory_space<vmem>>, %arg2: memref<4x1xf32, #tpu.memory_space<vmem>>, %arg3: memref<4x1xf32, #tpu.memory_space<vmem>>, %arg4: memref<128x4xf32, #tpu.memory_space<vmem>>, %arg5: memref<128x1xf32, #tpu.memory_space<vmem>>, %arg6: memref<4x128xf32, #tpu.memory_space<vmem>>, %arg7: memref<4x1xf32, #tpu.memory_space<vmem>>, %arg8: memref<4x128xf32, #tpu.memory_space<vmem>>) attributes {dimension_semantics = [#tpu.dimension_semantics<parallel>], iteration_bounds = array<i64: 1>, scalar_prefetch = 0 : i64, scratch_operands = 0 : i64, tpu.core_type = #tpu.core_type<tc>, window_params = [{transform_indices = @transform_0, window_bounds = array<i64: 4, 128>}, {pipeline_mode = #tpu.pipeline_mode<synchronous>, transform_indices = @transform_1, window_bounds = array<i64: 4, 1>}, {pipeline_mode = #tpu.pipeline_mode<synchronous>, transform_indices = @transform_2, window_bounds = array<i64: 4, 1>}, {pipeline_mode = #tpu.pipeline_mode<synchronous>, transform_indices = @transform_3, window_bounds = array<i64: 128, 4>}, {pipeline_mode = #tpu.pipeline_mode<synchronous>, transform_indices = @transform_4, window_bounds = array<i64: 128, 1>}, {pipeline_mode = #tpu.pipeline_mode<synchronous>, transform_indices = @transform_5, window_bounds = array<i64: 4, 128>}, {pipeline_mode = #tpu.pipeline_mode<synchronous>, transform_indices = @transform_6, window_bounds = array<i64: 4, 1>}, {transform_indices = @transform_7, window_bounds = array<i64: 4, 128>}]} {
    %c0 = arith.constant 0 : index
    %c0_0 = arith.constant 0 : index
    %0 = vector.load %arg1[%c0, %c0_0] : memref<4x128xf32, #tpu.memory_space<vmem>>, vector<4x128xf32>
    %cst = arith.constant dense<0.000000e+00> : vector<128xf32>
    %1 = vector.multi_reduction <add>, %0, %cst [0] : vector<4x128xf32> to vector<128xf32>
    %2 = vector.shape_cast %1 : vector<128xf32> to vector<1x128xf32>
    %cst_1 = arith.constant 4.000000e+00 : f32
    %3 = vector.broadcast %cst_1 : f32 to vector<1x128xf32>
    %4 = arith.divf %2, %3 : vector<1x128xf32>
    %5 = vector.broadcast %4 : vector<1x128xf32> to vector<4x128xf32>
    %6 = arith.subf %0, %5 : vector<4x128xf32>
    %7 = arith.mulf %6, %6 : vector<4x128xf32>
    %cst_2 = arith.constant dense<0.000000e+00> : vector<128xf32>
    %8 = vector.multi_reduction <add>, %7, %cst_2 [0] : vector<4x128xf32> to vector<128xf32>
    %9 = vector.shape_cast %8 : vector<128xf32> to vector<1x128xf32>
    %cst_3 = arith.constant 4.000000e+00 : f32
    %10 = vector.broadcast %cst_3 : f32 to vector<1x128xf32>
    %11 = arith.divf %9, %10 : vector<1x128xf32>
    %12 = vector.broadcast %4 : vector<1x128xf32> to vector<4x128xf32>
    %13 = arith.subf %0, %12 : vector<4x128xf32>
    %cst_4 = arith.constant 9.99999974E-6 : f32
    %14 = vector.broadcast %cst_4 : f32 to vector<1x128xf32>
    %15 = arith.addf %11, %14 : vector<1x128xf32>
    %16 = math.rsqrt %15 : vector<1x128xf32>
    %17 = vector.broadcast %16 : vector<1x128xf32> to vector<4x128xf32>
    %18 = arith.mulf %13, %17 : vector<4x128xf32>
    %c0_5 = arith.constant 0 : index
    %c0_6 = arith.constant 0 : index
    %19 = vector.load %arg2[%c0_5, %c0_6] : memref<4x1xf32, #tpu.memory_space<vmem>>, vector<4x1xf32>
    %20 = vector.broadcast %19 : vector<4x1xf32> to vector<4x128xf32>
    %21 = arith.mulf %18, %20 : vector<4x128xf32>
    %c0_7 = arith.constant 0 : index
    %c0_8 = arith.constant 0 : index
    %22 = vector.load %arg3[%c0_7, %c0_8] : memref<4x1xf32, #tpu.memory_space<vmem>>, vector<4x1xf32>
    %23 = vector.broadcast %22 : vector<4x1xf32> to vector<4x128xf32>
    %24 = arith.addf %21, %23 : vector<4x128xf32>
    %c0_9 = arith.constant 0 : index
    %c0_10 = arith.constant 0 : index
    %25 = vector.load %arg4[%c0_9, %c0_10] : memref<128x4xf32, #tpu.memory_space<vmem>>, vector<128x4xf32>
    %c0_11 = arith.constant 0 : index
    %c0_12 = arith.constant 0 : index
    %26 = vector.load %arg5[%c0_11, %c0_12] : memref<128x1xf32, #tpu.memory_space<vmem>>, vector<128x1xf32>
    %27 = vector.extract_strided_slice %25 {offsets = [0, 0], sizes = [128, 1], strides = [1, 1]} : vector<128x4xf32> to vector<128x1xf32>
    %28 = vector.extract_strided_slice %24 {offsets = [0, 0], sizes = [1, 128], strides = [1, 1]} : vector<4x128xf32> to vector<1x128xf32>
    %29 = vector.broadcast %27 : vector<128x1xf32> to vector<128x128xf32>
    %30 = vector.broadcast %28 : vector<1x128xf32> to vector<128x128xf32>
    %31 = arith.mulf %29, %30 : vector<128x128xf32>
    %32 = vector.broadcast %26 : vector<128x1xf32> to vector<128x128xf32>
    %33 = arith.addf %32, %31 : vector<128x128xf32>
    %34 = vector.extract_strided_slice %25 {offsets = [0, 1], sizes = [128, 1], strides = [1, 1]} : vector<128x4xf32> to vector<128x1xf32>
    %35 = vector.extract_strided_slice %24 {offsets = [1, 0], sizes = [1, 128], strides = [1, 1]} : vector<4x128xf32> to vector<1x128xf32>
    %36 = vector.broadcast %34 : vector<128x1xf32> to vector<128x128xf32>
    %37 = vector.broadcast %35 : vector<1x128xf32> to vector<128x128xf32>
    %38 = arith.mulf %36, %37 : vector<128x128xf32>
    %39 = arith.addf %33, %38 : vector<128x128xf32>
    %40 = vector.extract_strided_slice %25 {offsets = [0, 2], sizes = [128, 1], strides = [1, 1]} : vector<128x4xf32> to vector<128x1xf32>
    %41 = vector.extract_strided_slice %24 {offsets = [2, 0], sizes = [1, 128], strides = [1, 1]} : vector<4x128xf32> to vector<1x128xf32>
    %42 = vector.broadcast %40 : vector<128x1xf32> to vector<128x128xf32>
    %43 = vector.broadcast %41 : vector<1x128xf32> to vector<128x128xf32>
    %44 = arith.mulf %42, %43 : vector<128x128xf32>
    %45 = arith.addf %39, %44 : vector<128x128xf32>
    %46 = vector.extract_strided_slice %25 {offsets = [0, 3], sizes = [128, 1], strides = [1, 1]} : vector<128x4xf32> to vector<128x1xf32>
    %47 = vector.extract_strided_slice %24 {offsets = [3, 0], sizes = [1, 128], strides = [1, 1]} : vector<4x128xf32> to vector<1x128xf32>
    %48 = vector.broadcast %46 : vector<128x1xf32> to vector<128x128xf32>
    %49 = vector.broadcast %47 : vector<1x128xf32> to vector<128x128xf32>
    %50 = arith.mulf %48, %49 : vector<128x128xf32>
    %51 = arith.addf %45, %50 : vector<128x128xf32>
    %cst_13 = arith.constant 5.000000e-01 : f32
    %52 = vector.broadcast %cst_13 : f32 to vector<128x128xf32>
    %53 = arith.mulf %52, %51 : vector<128x128xf32>
    %cst_14 = arith.constant 0.707106769 : f32
    %54 = vector.broadcast %cst_14 : f32 to vector<128x128xf32>
    %55 = arith.mulf %51, %54 : vector<128x128xf32>
    %56 = math.erf %55 : vector<128x128xf32>
    %cst_15 = arith.constant 1.000000e+00 : f32
    %57 = vector.broadcast %cst_15 : f32 to vector<128x128xf32>
    %58 = arith.addf %57, %56 : vector<128x128xf32>
    %59 = arith.mulf %53, %58 : vector<128x128xf32>
    %c0_16 = arith.constant 0 : index
    %c0_17 = arith.constant 0 : index
    %60 = vector.load %arg6[%c0_16, %c0_17] : memref<4x128xf32, #tpu.memory_space<vmem>>, vector<4x128xf32>
    %cst_18 = arith.constant dense<0.000000e+00> : vector<4x128xf32>
    %61 = tpu.matmul %60, %59, %cst_18 {dimension_numbers = #tpu.dot_dimension_numbers<[1], [0], [0], [1], [0, 0, 1, 1], [], []>} : vector<4x128xf32>, vector<128x128xf32>, vector<4x128xf32> -> vector<4x128xf32>
    %c0_19 = arith.constant 0 : index
    %c0_20 = arith.constant 0 : index
    %62 = vector.load %arg7[%c0_19, %c0_20] : memref<4x1xf32, #tpu.memory_space<vmem>>, vector<4x1xf32>
    %63 = vector.broadcast %62 : vector<4x1xf32> to vector<4x128xf32>
    %64 = arith.addf %61, %63 : vector<4x128xf32>
    %c0_21 = arith.constant 0 : index
    %c0_22 = arith.constant 0 : index
    %65 = vector.load %arg8[%c0_21, %c0_22] : memref<4x128xf32, #tpu.memory_space<vmem>>, vector<4x128xf32>
    tpu.vector_store %arg8[%c0_21, %c0_22], %64 {strides = array<i32>} : memref<4x128xf32, #tpu.memory_space<vmem>>, vector<4x128xf32>,
    return
  }
  func.func @transform_0(%arg0: i32) -> (i32, i32) {
    %c0_i32 = arith.constant 0 : i32
    %c0_i32_0 = arith.constant 0 : i32
    return %c0_i32, %arg0 : i32, i32
  }
  func.func @transform_1(%arg0: i32) -> (i32, i32) {
    %c0_i32 = arith.constant 0 : i32
    %c0_i32_0 = arith.constant 0 : i32
    %c0_i32_1 = arith.constant 0 : i32
    return %c0_i32, %c0_i32_0 : i32, i32
  }
  func.func @transform_2(%arg0: i32) -> (i32, i32) {
    %c0_i32 = arith.constant 0 : i32
    %c0_i32_0 = arith.constant 0 : i32
    %c0_i32_1 = arith.constant 0 : i32
    return %c0_i32, %c0_i32_0 : i32, i32
  }
  func.func @transform_3(%arg0: i32) -> (i32, i32) {
    %c0_i32 = arith.constant 0 : i32
    %c0_i32_0 = arith.constant 0 : i32
    %c0_i32_1 = arith.constant 0 : i32
    return %c0_i32, %c0_i32_0 : i32, i32
  }
  func.func @transform_4(%arg0: i32) -> (i32, i32) {
    %c0_i32 = arith.constant 0 : i32
    %c0_i32_0 = arith.constant 0 : i32
    %c0_i32_1 = arith.constant 0 : i32
    return %c0_i32, %c0_i32_0 : i32, i32
  }
  func.func @transform_5(%arg0: i32) -> (i32, i32) {
    %c0_i32 = arith.constant 0 : i32
    %c0_i32_0 = arith.constant 0 : i32
    %c0_i32_1 = arith.constant 0 : i32
    return %c0_i32, %c0_i32_0 : i32, i32
  }
  func.func @transform_6(%arg0: i32) -> (i32, i32) {
    %c0_i32 = arith.constant 0 : i32
    %c0_i32_0 = arith.constant 0 : i32
    %c0_i32_1 = arith.constant 0 : i32
    return %c0_i32, %c0_i32_0 : i32, i32
  }
  func.func @transform_7(%arg0: i32) -> (i32, i32) {
    %c0_i32 = arith.constant 0 : i32
    %c0_i32_0 = arith.constant 0 : i32
    return %c0_i32, %arg0 : i32, i32
  }
}

</mosaic_0001>

<llo_original>
// kernel: tpu_custom_call.1
$region0: #{tpu_custom_call.1}
  #allocation0 [shape = 'u32[]', space=smem, size = 0x4, offset = 0x4, fixed_abs, tag = 'smem constant byte address 0x4 - core index']
  #allocation1 [shape = 'u32[144,128]{1,0:T(1,128)}', space=vmem, size = 0x12000, scoped, tag = 'internal scratch']
  %s0 = inlined_call_operand.vmem [shape: f32[4,128], index: 0, kind: input, shape index: {}]
  %s1 = inlined_call_operand.vmem [shape: f32[4,1], index: 1, kind: input, shape index: {}]
  %s2 = inlined_call_operand.vmem [shape: f32[4,1], index: 2, kind: input, shape index: {}]
  %s3 = inlined_call_operand.vmem [shape: f32[128,4], index: 3, kind: input, shape index: {}]
  %s4 = inlined_call_operand.vmem [shape: f32[128,1], index: 4, kind: input, shape index: {}]
  %s5 = inlined_call_operand.vmem [shape: f32[4,128], index: 5, kind: input, shape index: {}]
  %s6 = inlined_call_operand.vmem [shape: f32[4,1], index: 6, kind: input, shape index: {}]
  %s7 = inlined_call_operand.hbm [shape: f32[4,128], index: 7, kind: output, shape index: {}]
  %s8 = sld [smem:[#allocation0]]
  $region38: #{tpu_custom_call.1} parent=0
    _
  %s10 = ssub.s32 1, %s8
  %s11 = scalar_select 0, %s10, %s8
  $region1: #{tpu_custom_call.1} parent=0
    #allocation2 [shape = 'u8[2048]{0}', space=vmem, size = 0x800, scoped, tag = 'output window, operand 0, single buffered']
    #allocation3 [shape = 's32[1]{0}', space=sflag, size = 0x4, scoped, tag = 'scoped memory for tpu_custom_call.1']
    %12 = vsyncpa [#allocation3], 0
    // Predicated region
    $region2: #{tpu_custom_call.1} parent=1 // pred_check
      _
    $region3: #{tpu_custom_call.1} parent=1 // pred_check_branch
      %14 = sbr.rel (0) target = $region5
    $region4: #{tpu_custom_call.1} parent=1 // pred_region
      _
    $region5: #{tpu_custom_call.1} parent=1 // pred_fallthru
      _
    // Predicated region
    $region6: #{tpu_custom_call.1} parent=1 // pred_check
      _
    $region7: #{tpu_custom_call.1} parent=1 // pred_check_branch
      %16 = sbr.rel (0) target = $region9
    $region8: #{tpu_custom_call.1} parent=1 // pred_region
      _
    $region9: #{tpu_custom_call.1} parent=1 // pred_fallthru
      _
    // Predicated region
    $region10: #{tpu_custom_call.1} parent=1 // pred_check
      _
    $region11: #{tpu_custom_call.1} parent=1 // pred_check_branch
      %18 = sbr.rel (0) target = $region13
    $region12: #{tpu_custom_call.1} parent=1 // pred_region
      _
    $region13: #{tpu_custom_call.1} parent=1 // pred_fallthru
      _
    // Predicated region
    $region14: #{tpu_custom_call.1} parent=1 // pred_check
      _
    $region15: #{tpu_custom_call.1} parent=1 // pred_check_branch
      %20 = sbr.rel (0) target = $region17
    $region16: #{tpu_custom_call.1} parent=1 // pred_region
      _
    $region17: #{tpu_custom_call.1} parent=1 // pred_fallthru
      _
    // Predicated region
    $region18: #{tpu_custom_call.1} parent=1 // pred_check
      _
    $region19: #{tpu_custom_call.1} parent=1 // pred_check_branch
      %22 = sbr.rel (0) target = $region21
    $region20: #{tpu_custom_call.1} parent=1 // pred_region
      _
    $region21: #{tpu_custom_call.1} parent=1 // pred_fallthru
      _
    // Predicated region
    $region22: #{tpu_custom_call.1} parent=1 // pred_check
      _
    $region23: #{tpu_custom_call.1} parent=1 // pred_check_branch
      %24 = sbr.rel (0) target = $region25
    $region24: #{tpu_custom_call.1} parent=1 // pred_region
      _
    $region25: #{tpu_custom_call.1} parent=1 // pred_fallthru
      _
    // Predicated region
    $region26: #{tpu_custom_call.1} parent=1 // pred_check
      _
    $region27: #{tpu_custom_call.1} parent=1 // pred_check_branch
      %26 = sbr.rel (0) target = $region29
    $region28: #{tpu_custom_call.1} parent=1 // pred_region
      _
    $region29: #{tpu_custom_call.1} parent=1 // pred_fallthru
      _
    %v27 = vld [vmem:[%s0] sm:$0xf]
    %vm28 = vcmask 1043456
    %v29 = vsel %vm28, %v27, 0.0
    %v30 = vrot.slane %v29, 4
    %v31 = vadd.f32 %v29, %v30
    %v32 = vrot.slane %v31, 2
    %v33 = vadd.f32 %v31, %v32
    %v34 = vrot.slane %v33, 1
    %v35 = vadd.f32 %v33, %v34
    %v36 = vrcp.pop 4.0
    %v37 = vmul.f32 %v35, %v36
    %v38 = vsub.f32 %v27, %v37
    %v39 = vmul.f32 %v38, %v38
    %v40 = vsel %vm28, %v39, 0.0
    %v41 = vrot.slane %v40, 4
    %v42 = vadd.f32 %v40, %v41
    %v43 = vrot.slane %v42, 2
    %v44 = vadd.f32 %v42, %v43
    %v45 = vrot.slane %v44, 1
    %v46 = vadd.f32 %v44, %v45
    %v47 = vmul.f32 %v46, %v36
    %v48 = vadd.f32 %v47, 1e-05
    %v49 = vrsqrt.pop %v48
    %v50 = vmul.f32 %v38, %v49
    %v51 = vld [vmem:[%s1] sm:$0xf]
    %53 = vset.pattern.permute.xlu0 0
    %54 = vperm.xlu0 %53, %v51
    %v55 = vpop.permute.xlu0 %54
    %v57 = vmul.f32 %v50, %v55
    %v58 = vld [vmem:[%s2] sm:$0xf]
    %60 = vset.pattern.permute.xlu0 0
    %61 = vperm.xlu0 %60, %v58
    %v62 = vpop.permute.xlu0 %61
    %v64 = vadd.f32 %v57, %v62
    %v65 = vld [vmem:[%s3] sm:$0xff]
    %v66 = vld [vmem:[%s3 + $0x8] sm:$0xff]
    %v67 = vld [vmem:[%s3 + $0x10] sm:$0xff]
    %v68 = vld [vmem:[%s3 + $0x18] sm:$0xff]
    %v69 = vld [vmem:[%s3 + $0x20] sm:$0xff]
    %v70 = vld [vmem:[%s3 + $0x28] sm:$0xff]
    %v71 = vld [vmem:[%s3 + $0x30] sm:$0xff]
    %v72 = vld [vmem:[%s3 + $0x38] sm:$0xff]
    %v73 = vld [vmem:[%s3 + $0x40] sm:$0xff]
    %v74 = vld [vmem:[%s3 + $0x48] sm:$0xff]
    %v75 = vld [vmem:[%s3 + $0x50] sm:$0xff]
    %v76 = vld [vmem:[%s3 + $0x58] sm:$0xff]
    %v77 = vld [vmem:[%s3 + $0x60] sm:$0xff]
    %v78 = vld [vmem:[%s3 + $0x68] sm:$0xff]
    %v79 = vld [vmem:[%s3 + $0x70] sm:$0xff]
    %v80 = vld [vmem:[%s3 + $0x78] sm:$0xff]
    %v81 = vld [vmem:[%s4] sm:$0xff]
    %v82 = vld [vmem:[%s4 + $0x8] sm:$0xff]
    %v83 = vld [vmem:[%s4 + $0x10] sm:$0xff]
    %v84 = vld [vmem:[%s4 + $0x18] sm:$0xff]
    %v85 = vld [vmem:[%s4 + $0x20] sm:$0xff]
    %v86 = vld [vmem:[%s4 + $0x28] sm:$0xff]
    %v87 = vld [vmem:[%s4 + $0x30] sm:$0xff]
    %v88 = vld [vmem:[%s4 + $0x38] sm:$0xff]
    %v89 = vld [vmem:[%s4 + $0x40] sm:$0xff]
    %v90 = vld [vmem:[%s4 + $0x48] sm:$0xff]
    %v91 = vld [vmem:[%s4 + $0x50] sm:$0xff]
    %v92 = vld [vmem:[%s4 + $0x58] sm:$0xff]
    %v93 = vld [vmem:[%s4 + $0x60] sm:$0xff]
    %v94 = vld [vmem:[%s4 + $0x68] sm:$0xff]
    %v95 = vld [vmem:[%s4 + $0x70] sm:$0xff]
    %v96 = vld [vmem:[%s4 + $0x78] sm:$0xff]
    %98 = vset.pattern.permute.xlu0 0
    %99 = vperm.xlu0 %98, %v65
    %v100 = vpop.permute.xlu0 %99
    %103 = vset.pattern.permute.xlu0 0
    %104 = vperm.xlu0 %103, %v66
    %v105 = vpop.permute.xlu0 %104
    %108 = vset.pattern.permute.xlu0 0
    %109 = vperm.xlu0 %108, %v67
    %v110 = vpop.permute.xlu0 %109
    %113 = vset.pattern.permute.xlu0 0
    %114 = vperm.xlu0 %113, %v68
    %v115 = vpop.permute.xlu0 %114
    %118 = vset.pattern.permute.xlu0 0
    %119 = vperm.xlu0 %118, %v69
    %v120 = vpop.permute.xlu0 %119
    %123 = vset.pattern.permute.xlu0 0
    %124 = vperm.xlu0 %123, %v70
    %v125 = vpop.permute.xlu0 %124
    %128 = vset.pattern.permute.xlu0 0
    %129 = vperm.xlu0 %128, %v71
    %v130 = vpop.permute.xlu0 %129
    %133 = vset.pattern.permute.xlu0 0
    %134 = vperm.xlu0 %133, %v72
    %v135 = vpop.permute.xlu0 %134
    %138 = vset.pattern.permute.xlu0 0
    %139 = vperm.xlu0 %138, %v73
    %v140 = vpop.permute.xlu0 %139
    %143 = vset.pattern.permute.xlu0 0
    %144 = vperm.xlu0 %143, %v74
    %v145 = vpop.permute.xlu0 %144
    %148 = vset.pattern.permute.xlu0 0
    %149 = vperm.xlu0 %148, %v75
    %v150 = vpop.permute.xlu0 %149
    %153 = vset.pattern.permute.xlu0 0
    %154 = vperm.xlu0 %153, %v76
    %v155 = vpop.permute.xlu0 %154
    %158 = vset.pattern.permute.xlu0 0
    %159 = vperm.xlu0 %158, %v77
    %v160 = vpop.permute.xlu0 %159
    %163 = vset.pattern.permute.xlu0 0
    %164 = vperm.xlu0 %163, %v78
    %v165 = vpop.permute.xlu0 %164
    %168 = vset.pattern.permute.xlu0 0
    %169 = vperm.xlu0 %168, %v79
    %v170 = vpop.permute.xlu0 %169
    %173 = vset.pattern.permute.xlu0 0
    %174 = vperm.xlu0 %173, %v80
    %v175 = vpop.permute.xlu0 %174
    %v177 = vlaneseq
    %v178 = vshrl.u32 %v177, 7
    %v179 = vsub.s32 0, %v178
    %v180 = vrot.slane %v64, %v179
    %v181 = vmul.f32 %v100, %v180
    %v182 = vmul.f32 %v105, %v180
    %v183 = vmul.f32 %v110, %v180
    %v184 = vmul.f32 %v115, %v180
    %v185 = vmul.f32 %v120, %v180
    %v186 = vmul.f32 %v125, %v180
    %v187 = vmul.f32 %v130, %v180
    %v188 = vmul.f32 %v135, %v180
    %v189 = vmul.f32 %v140, %v180
    %v190 = vmul.f32 %v145, %v180
    %v191 = vmul.f32 %v150, %v180
    %v192 = vmul.f32 %v155, %v180
    %v193 = vmul.f32 %v160, %v180
    %v194 = vmul.f32 %v165, %v180
    %v195 = vmul.f32 %v170, %v180
    %v196 = vmul.f32 %v175, %v180
    %198 = vset.pattern.permute.xlu0 0
    %199 = vperm.xlu0 %198, %v81
    %v200 = vpop.permute.xlu0 %199
    %203 = vset.pattern.permute.xlu0 0
    %204 = vperm.xlu0 %203, %v82
    %v205 = vpop.permute.xlu0 %204
    %208 = vset.pattern.permute.xlu0 0
    %209 = vperm.xlu0 %208, %v83
    %v210 = vpop.permute.xlu0 %209
    %213 = vset.pattern.permute.xlu0 0
    %214 = vperm.xlu0 %213, %v84
    %v215 = vpop.permute.xlu0 %214
    %218 = vset.pattern.permute.xlu0 0
    %219 = vperm.xlu0 %218, %v85
    %v220 = vpop.permute.xlu0 %219
    %223 = vset.pattern.permute.xlu0 0
    %224 = vperm.xlu0 %223, %v86
    %v225 = vpop.permute.xlu0 %224
    %228 = vset.pattern.permute.xlu0 0
    %229 = vperm.xlu0 %228, %v87
    %v230 = vpop.permute.xlu0 %229
    %233 = vset.pattern.permute.xlu0 0
    %234 = vperm.xlu0 %233, %v88
    %v235 = vpop.permute.xlu0 %234
    %238 = vset.pattern.permute.xlu0 0
    %239 = vperm.xlu0 %238, %v89
    %v240 = vpop.permute.xlu0 %239
    %243 = vset.pattern.permute.xlu0 0
    %244 = vperm.xlu0 %243, %v90
    %v245 = vpop.permute.xlu0 %244
    %248 = vset.pattern.permute.xlu0 0
    %249 = vperm.xlu0 %248, %v91
    %v250 = vpop.permute.xlu0 %249
    %253 = vset.pattern.permute.xlu0 0
    %254 = vperm.xlu0 %253, %v92
    %v255 = vpop.permute.xlu0 %254
    %258 = vset.pattern.permute.xlu0 0
    %259 = vperm.xlu0 %258, %v93
    %v260 = vpop.permute.xlu0 %259
    %263 = vset.pattern.permute.xlu0 0
    %264 = vperm.xlu0 %263, %v94
    %v265 = vpop.permute.xlu0 %264
    %268 = vset.pattern.permute.xlu0 0
    %269 = vperm.xlu0 %268, %v95
    %v270 = vpop.permute.xlu0 %269
    %273 = vset.pattern.permute.xlu0 0
    %274 = vperm.xlu0 %273, %v96
    %v275 = vpop.permute.xlu0 %274
    %v277 = vadd.f32 %v200, %v181
    %v278 = vadd.f32 %v205, %v182
    %v279 = vadd.f32 %v210, %v183
    %v280 = vadd.f32 %v215, %v184
    %v281 = vadd.f32 %v220, %v185
    %v282 = vadd.f32 %v225, %v186
    %v283 = vadd.f32 %v230, %v187
    %v284 = vadd.f32 %v235, %v188
    %v285 = vadd.f32 %v240, %v189
    %v286 = vadd.f32 %v245, %v190
    %v287 = vadd.f32 %v250, %v191
    %v288 = vadd.f32 %v255, %v192
    %v289 = vadd.f32 %v260, %v193
    %v290 = vadd.f32 %v265, %v194
    %v291 = vadd.f32 %v270, %v195
    %v292 = vadd.f32 %v275, %v196
    %293 = vset.pattern.permute.xlu0 1
    %294 = vperm.xlu0 %293, %v65
    %v295 = vpop.permute.xlu0 %294
    %297 = vset.pattern.permute.xlu0 1
    %298 = vperm.xlu0 %297, %v66
    %v299 = vpop.permute.xlu0 %298
    %301 = vset.pattern.permute.xlu0 1
    %302 = vperm.xlu0 %301, %v67
    %v303 = vpop.permute.xlu0 %302
    %305 = vset.pattern.permute.xlu0 1
    %306 = vperm.xlu0 %305, %v68
    %v307 = vpop.permute.xlu0 %306
    %309 = vset.pattern.permute.xlu0 1
    %310 = vperm.xlu0 %309, %v69
    %v311 = vpop.permute.xlu0 %310
    %313 = vset.pattern.permute.xlu0 1
    %314 = vperm.xlu0 %313, %v70
    %v315 = vpop.permute.xlu0 %314
    %317 = vset.pattern.permute.xlu0 1
    %318 = vperm.xlu0 %317, %v71
    %v319 = vpop.permute.xlu0 %318
    %321 = vset.pattern.permute.xlu0 1
    %322 = vperm.xlu0 %321, %v72
    %v323 = vpop.permute.xlu0 %322
    %325 = vset.pattern.permute.xlu0 1
    %326 = vperm.xlu0 %325, %v73
    %v327 = vpop.permute.xlu0 %326
    %329 = vset.pattern.permute.xlu0 1
    %330 = vperm.xlu0 %329, %v74
    %v331 = vpop.permute.xlu0 %330
    %333 = vset.pattern.permute.xlu0 1
    %334 = vperm.xlu0 %333, %v75
    %v335 = vpop.permute.xlu0 %334
    %337 = vset.pattern.permute.xlu0 1
    %338 = vperm.xlu0 %337, %v76
    %v339 = vpop.permute.xlu0 %338
    %341 = vset.pattern.permute.xlu0 1
    %342 = vperm.xlu0 %341, %v77
    %v343 = vpop.permute.xlu0 %342
    %345 = vset.pattern.permute.xlu0 1
    %346 = vperm.xlu0 %345, %v78
    %v347 = vpop.permute.xlu0 %346
    %349 = vset.pattern.permute.xlu0 1
    %350 = vperm.xlu0 %349, %v79
    %v351 = vpop.permute.xlu0 %350
    %353 = vset.pattern.permute.xlu0 1
    %354 = vperm.xlu0 %353, %v80
    %v355 = vpop.permute.xlu0 %354
    %v357 = vlaneseq
    %v358 = vshrl.u32 %v357, 7
    %v359 = vsub.s32 1, %v358
    %v360 = vrot.slane %v64, %v359
    %v361 = vmul.f32 %v295, %v360
    %v362 = vmul.f32 %v299, %v360
    %v363 = vmul.f32 %v303, %v360
    %v364 = vmul.f32 %v307, %v360
    %v365 = vmul.f32 %v311, %v360
    %v366 = vmul.f32 %v315, %v360
    %v367 = vmul.f32 %v319, %v360
    %v368 = vmul.f32 %v323, %v360
    %v369 = vmul.f32 %v327, %v360
    %v370 = vmul.f32 %v331, %v360
    %v371 = vmul.f32 %v335, %v360
    %v372 = vmul.f32 %v339, %v360
    %v373 = vmul.f32 %v343, %v360
    %v374 = vmul.f32 %v347, %v360
    %v375 = vmul.f32 %v351, %v360
    %v376 = vmul.f32 %v355, %v360
    %v377 = vadd.f32 %v277, %v361
    %v378 = vadd.f32 %v278, %v362
    %v379 = vadd.f32 %v279, %v363
    %v380 = vadd.f32 %v280, %v364
    %v381 = vadd.f32 %v281, %v365
    %v382 = vadd.f32 %v282, %v366
    %v383 = vadd.f32 %v283, %v367
    %v384 = vadd.f32 %v284, %v368
    %v385 = vadd.f32 %v285, %v369
    %v386 = vadd.f32 %v286, %v370
    %v387 = vadd.f32 %v287, %v371
    %v388 = vadd.f32 %v288, %v372
    %v389 = vadd.f32 %v289, %v373
    %v390 = vadd.f32 %v290, %v374
    %v391 = vadd.f32 %v291, %v375
    %v392 = vadd.f32 %v292, %v376
    %393 = vset.pattern.permute.xlu0 2
    %394 = vperm.xlu0 %393, %v65
    %v395 = vpop.permute.xlu0 %394
    %397 = vset.pattern.permute.xlu0 2
    %398 = vperm.xlu0 %397, %v66
    %v399 = vpop.permute.xlu0 %398
    %401 = vset.pattern.permute.xlu0 2
    %402 = vperm.xlu0 %401, %v67
    %v403 = vpop.permute.xlu0 %402
    %405 = vset.pattern.permute.xlu0 2
    %406 = vperm.xlu0 %405, %v68
    %v407 = vpop.permute.xlu0 %406
    %409 = vset.pattern.permute.xlu0 2
    %410 = vperm.xlu0 %409, %v69
    %v411 = vpop.permute.xlu0 %410
    %413 = vset.pattern.permute.xlu0 2
    %414 = vperm.xlu0 %413, %v70
    %v415 = vpop.permute.xlu0 %414
    %417 = vset.pattern.permute.xlu0 2
    %418 = vperm.xlu0 %417, %v71
    %v419 = vpop.permute.xlu0 %418
    %421 = vset.pattern.permute.xlu0 2
    %422 = vperm.xlu0 %421, %v72
    %v423 = vpop.permute.xlu0 %422
    %425 = vset.pattern.permute.xlu0 2
    %426 = vperm.xlu0 %425, %v73
    %v427 = vpop.permute.xlu0 %426
    %429 = vset.pattern.permute.xlu0 2
    %430 = vperm.xlu0 %429, %v74
    %v431 = vpop.permute.xlu0 %430
    %433 = vset.pattern.permute.xlu0 2
    %434 = vperm.xlu0 %433, %v75
    %v435 = vpop.permute.xlu0 %434
    %437 = vset.pattern.permute.xlu0 2
    %438 = vperm.xlu0 %437, %v76
    %v439 = vpop.permute.xlu0 %438
    %441 = vset.pattern.permute.xlu0 2
    %442 = vperm.xlu0 %441, %v77
    %v443 = vpop.permute.xlu0 %442
    %445 = vset.pattern.permute.xlu0 2
    %446 = vperm.xlu0 %445, %v78
    %v447 = vpop.permute.xlu0 %446
    %449 = vset.pattern.permute.xlu0 2
    %450 = vperm.xlu0 %449, %v79
    %v451 = vpop.permute.xlu0 %450
    %453 = vset.pattern.permute.xlu0 2
    %454 = vperm.xlu0 %453, %v80
    %v455 = vpop.permute.xlu0 %454
    %v457 = vlaneseq
    %v458 = vshrl.u32 %v457, 7
    %v459 = vsub.s32 2, %v458
    %v460 = vrot.slane %v64, %v459
    %v461 = vmul.f32 %v395, %v460
    %v462 = vmul.f32 %v399, %v460
    %v463 = vmul.f32 %v403, %v460
    %v464 = vmul.f32 %v407, %v460
    %v465 = vmul.f32 %v411, %v460
    %v466 = vmul.f32 %v415, %v460
    %v467 = vmul.f32 %v419, %v460
    %v468 = vmul.f32 %v423, %v460
    %v469 = vmul.f32 %v427, %v460
    %v470 = vmul.f32 %v431, %v460
    %v471 = vmul.f32 %v435, %v460
    %v472 = vmul.f32 %v439, %v460
    %v473 = vmul.f32 %v443, %v460
    %v474 = vmul.f32 %v447, %v460
    %v475 = vmul.f32 %v451, %v460
    %v476 = vmul.f32 %v455, %v460
    %v477 = vadd.f32 %v377, %v461
    %v478 = vadd.f32 %v378, %v462
    %v479 = vadd.f32 %v379, %v463
    %v480 = vadd.f32 %v380, %v464
    %v481 = vadd.f32 %v381, %v465
    %v482 = vadd.f32 %v382, %v466
    %v483 = vadd.f32 %v383, %v467
    %v484 = vadd.f32 %v384, %v468
    %v485 = vadd.f32 %v385, %v469
    %v486 = vadd.f32 %v386, %v470
    %v487 = vadd.f32 %v387, %v471
    %v488 = vadd.f32 %v388, %v472
    %v489 = vadd.f32 %v389, %v473
    %v490 = vadd.f32 %v390, %v474
    %v491 = vadd.f32 %v391, %v475
    %v492 = vadd.f32 %v392, %v476
    %493 = vset.pattern.permute.xlu0 3
    %494 = vperm.xlu0 %493, %v65
    %v495 = vpop.permute.xlu0 %494
    %497 = vset.pattern.permute.xlu0 3
    %498 = vperm.xlu0 %497, %v66
    %v499 = vpop.permute.xlu0 %498
    %501 = vset.pattern.permute.xlu0 3
    %502 = vperm.xlu0 %501, %v67
    %v503 = vpop.permute.xlu0 %502
    %505 = vset.pattern.permute.xlu0 3
    %506 = vperm.xlu0 %505, %v68
    %v507 = vpop.permute.xlu0 %506
    %509 = vset.pattern.permute.xlu0 3
    %510 = vperm.xlu0 %509, %v69
    %v511 = vpop.permute.xlu0 %510
    %513 = vset.pattern.permute.xlu0 3
    %514 = vperm.xlu0 %513, %v70
    %v515 = vpop.permute.xlu0 %514
    %517 = vset.pattern.permute.xlu0 3
    %518 = vperm.xlu0 %517, %v71
    %v519 = vpop.permute.xlu0 %518
    %521 = vset.pattern.permute.xlu0 3
    %522 = vperm.xlu0 %521, %v72
    %v523 = vpop.permute.xlu0 %522
    %525 = vset.pattern.permute.xlu0 3
    %526 = vperm.xlu0 %525, %v73
    %v527 = vpop.permute.xlu0 %526
    %529 = vset.pattern.permute.xlu0 3
    %530 = vperm.xlu0 %529, %v74
    %v531 = vpop.permute.xlu0 %530
    %533 = vset.pattern.permute.xlu0 3
    %534 = vperm.xlu0 %533, %v75
    %v535 = vpop.permute.xlu0 %534
    %537 = vset.pattern.permute.xlu0 3
    %538 = vperm.xlu0 %537, %v76
    %v539 = vpop.permute.xlu0 %538
    %541 = vset.pattern.permute.xlu0 3
    %542 = vperm.xlu0 %541, %v77
    %v543 = vpop.permute.xlu0 %542
    %545 = vset.pattern.permute.xlu0 3
    %546 = vperm.xlu0 %545, %v78
    %v547 = vpop.permute.xlu0 %546
    %549 = vset.pattern.permute.xlu0 3
    %550 = vperm.xlu0 %549, %v79
    %v551 = vpop.permute.xlu0 %550
    %553 = vset.pattern.permute.xlu0 3
    %554 = vperm.xlu0 %553, %v80
    %v555 = vpop.permute.xlu0 %554
    %v557 = vlaneseq
    %v558 = vshrl.u32 %v557, 7
    %v559 = vsub.s32 3, %v558
    %v560 = vrot.slane %v64, %v559
    %v561 = vmul.f32 %v495, %v560
    %v562 = vmul.f32 %v499, %v560
    %v563 = vmul.f32 %v503, %v560
    %v564 = vmul.f32 %v507, %v560
    %v565 = vmul.f32 %v511, %v560
    %v566 = vmul.f32 %v515, %v560
    %v567 = vmul.f32 %v519, %v560
    %v568 = vmul.f32 %v523, %v560
    %v569 = vmul.f32 %v527, %v560
    %v570 = vmul.f32 %v531, %v560
    %v571 = vmul.f32 %v535, %v560
    %v572 = vmul.f32 %v539, %v560
    %v573 = vmul.f32 %v543, %v560
    %v574 = vmul.f32 %v547, %v560
    %v575 = vmul.f32 %v551, %v560
    %v576 = vmul.f32 %v555, %v560
    %v577 = vadd.f32 %v477, %v561
    %v578 = vadd.f32 %v478, %v562
    %v579 = vadd.f32 %v479, %v563
    %v580 = vadd.f32 %v480, %v564
    %v581 = vadd.f32 %v481, %v565
    %v582 = vadd.f32 %v482, %v566
    %v583 = vadd.f32 %v483, %v567
    %v584 = vadd.f32 %v484, %v568
    %v585 = vadd.f32 %v485, %v569
    %v586 = vadd.f32 %v486, %v570
    %v587 = vadd.f32 %v487, %v571
    %v588 = vadd.f32 %v488, %v572
    %v589 = vadd.f32 %v489, %v573
    %v590 = vadd.f32 %v490, %v574
    %v591 = vadd.f32 %v491, %v575
    %v592 = vadd.f32 %v492, %v576
    %v593 = vmul.f32 %v577, 0.5
    %v594 = vmul.f32 %v578, 0.5
    %v595 = vmul.f32 %v579, 0.5
    %v596 = vmul.f32 %v580, 0.5
    %v597 = vmul.f32 %v581, 0.5
    %v598 = vmul.f32 %v582, 0.5
    %v599 = vmul.f32 %v583, 0.5
    %v600 = vmul.f32 %v584, 0.5
    %v601 = vmul.f32 %v585, 0.5
    %v602 = vmul.f32 %v586, 0.5
    %v603 = vmul.f32 %v587, 0.5
    %v604 = vmul.f32 %v588, 0.5
    %v605 = vmul.f32 %v589, 0.5
    %v606 = vmul.f32 %v590, 0.5
    %v607 = vmul.f32 %v591, 0.5
    %v608 = vmul.f32 %v592, 0.5
    %v609 = vmul.f32 %v577, 0.70710677
    %v610 = vmul.f32 %v578, 0.70710677
    %v611 = vmul.f32 %v579, 0.70710677
    %v612 = vmul.f32 %v580, 0.70710677
    %v613 = vmul.f32 %v581, 0.70710677
    %v614 = vmul.f32 %v582, 0.70710677
    %v615 = vmul.f32 %v583, 0.70710677
    %v616 = vmul.f32 %v584, 0.70710677
    %v617 = vmul.f32 %v585, 0.70710677
    %v618 = vmul.f32 %v586, 0.70710677
    %v619 = vmul.f32 %v587, 0.70710677
    %v620 = vmul.f32 %v588, 0.70710677
    %v621 = vmul.f32 %v589, 0.70710677
    %v622 = vmul.f32 %v590, 0.70710677
    %v623 = vmul.f32 %v591, 0.70710677
    %v624 = vmul.f32 %v592, 0.70710677
    %v625 = verf.f32.pop %v609
    %v626 = verf.f32.pop %v610
    %v627 = verf.f32.pop %v611
    %v628 = verf.f32.pop %v612
    %v629 = verf.f32.pop %v613
    %v630 = verf.f32.pop %v614
    %v631 = verf.f32.pop %v615
    %v632 = verf.f32.pop %v616
    %v633 = verf.f32.pop %v617
    %v634 = verf.f32.pop %v618
    %v635 = verf.f32.pop %v619
    %v636 = verf.f32.pop %v620
    %v637 = verf.f32.pop %v621
    %v638 = verf.f32.pop %v622
    %v639 = verf.f32.pop %v623
    %v640 = verf.f32.pop %v624
    %v641 = vadd.f32 %v625, 1.0
    %v642 = vadd.f32 %v626, 1.0
    %v643 = vadd.f32 %v627, 1.0
    %v644 = vadd.f32 %v628, 1.0
    %v645 = vadd.f32 %v629, 1.0
    %v646 = vadd.f32 %v630, 1.0
    %v647 = vadd.f32 %v631, 1.0
    %v648 = vadd.f32 %v632, 1.0
    %v649 = vadd.f32 %v633, 1.0
    %v650 = vadd.f32 %v634, 1.0
    %v651 = vadd.f32 %v635, 1.0
    %v652 = vadd.f32 %v636, 1.0
    %v653 = vadd.f32 %v637, 1.0
    %v654 = vadd.f32 %v638, 1.0
    %v655 = vadd.f32 %v639, 1.0
    %v656 = vadd.f32 %v640, 1.0
    %v657 = vmul.f32 %v593, %v641
    %v658 = vmul.f32 %v594, %v642
    %v659 = vmul.f32 %v595, %v643
    %v660 = vmul.f32 %v596, %v644
    %v661 = vmul.f32 %v597, %v645
    %v662 = vmul.f32 %v598, %v646
    %v663 = vmul.f32 %v599, %v647
    %v664 = vmul.f32 %v600, %v648
    %v665 = vmul.f32 %v601, %v649
    %v666 = vmul.f32 %v602, %v650
    %v667 = vmul.f32 %v603, %v651
    %v668 = vmul.f32 %v604, %v652
    %v669 = vmul.f32 %v605, %v653
    %v670 = vmul.f32 %v606, %v654
    %v671 = vmul.f32 %v607, %v655
    %v672 = vmul.f32 %v608, %v656
    %v673 = vld [vmem:[%s5] sm:$0xf]
    %v674 = vld [vmem:[%s6] sm:$0xf]
    %676 = vset.pattern.permute.xlu0 0
    %677 = vperm.xlu0 %676, %v674
    %v678 = vpop.permute.xlu0 %677
    %680 = vmatprep.subr.mxu0 0.0
    %681 = vmatpush1.msra.mxu0 %v657
    %682 = vmatprep.subr.mxu0 0.0
    %683 = vmatpush1.msra.mxu0 %v658
    %684 = vmatprep.subr.mxu0 0.0
    %685 = vmatpush1.msra.mxu0 %v659
    %686 = vmatprep.subr.mxu0 0.0
    %687 = vmatpush1.msra.mxu0 %v660
    %688 = vmatprep.subr.mxu0 0.0
    %689 = vmatpush1.msra.mxu0 %v661
    %690 = vmatprep.subr.mxu0 0.0
    %691 = vmatpush1.msra.mxu0 %v662
    %692 = vmatprep.subr.mxu0 0.0
    %693 = vmatpush1.msra.mxu0 %v663
    %694 = vmatprep.subr.mxu0 0.0
    %695 = vmatpush1.msra.mxu0 %v664
    %696 = vmatprep.subr.mxu0 0.0
    %697 = vmatpush1.msra.mxu0 %v665
    %698 = vmatprep.subr.mxu0 0.0
    %699 = vmatpush1.msra.mxu0 %v666
    %700 = vmatprep.subr.mxu0 0.0
    %701 = vmatpush1.msra.mxu0 %v667
    %702 = vmatprep.subr.mxu0 0.0
    %703 = vmatpush1.msra.mxu0 %v668
    %704 = vmatprep.subr.mxu0 0.0
    %705 = vmatpush1.msra.mxu0 %v669
    %706 = vmatprep.subr.mxu0 0.0
    %707 = vmatpush1.msra.mxu0 %v670
    %708 = vmatprep.subr.mxu0 0.0
    %709 = vmatpush1.msra.mxu0 %v671
    %710 = vmatprep.subr.mxu0 0.0
    %711 = vmatpush1.msra.mxu0 %v672
    %712 = vmatprep.subr.mxu0 0.0
    %713 = vmatpush1.msra.mxu0 0.0
    %714 = vmatprep.subr.mxu0 0.0
    %715 = vmatpush1.msra.mxu0 0.0
    %716 = vmatprep.subr.mxu0 0.0
    %717 = vmatpush1.msra.mxu0 0.0
    %718 = vmatprep.subr.mxu0 0.0
    %719 = vmatpush1.msra.mxu0 0.0
    %720 = vmatprep.subr.mxu0 0.0
    %721 = vmatpush1.msra.mxu0 0.0
    %722 = vmatprep.subr.mxu0 0.0
    %723 = vmatpush1.msra.mxu0 0.0
    %724 = vmatprep.subr.mxu0 0.0
    %725 = vmatpush1.msra.mxu0 0.0
    %726 = vmatprep.subr.mxu0 0.0
    %727 = vmatpush1.msra.mxu0 0.0
    %728 = vmatprep.subr.mxu0 0.0
    %729 = vmatpush1.msra.mxu0 0.0
    %730 = vmatprep.subr.mxu0 0.0
    %731 = vmatpush1.msra.mxu0 0.0
    %732 = vmatprep.subr.mxu0 0.0
    %733 = vmatpush1.msra.mxu0 0.0
    %734 = vmatprep.subr.mxu0 0.0
    %735 = vmatpush1.msra.mxu0 0.0
    %736 = vmatprep.subr.mxu0 0.0
    %737 = vmatpush1.msra.mxu0 0.0
    %738 = vmatprep.subr.mxu0 0.0
    %739 = vmatpush1.msra.mxu0 0.0
    %740 = vmatprep.subr.mxu0 0.0
    %741 = vmatpush1.msra.mxu0 0.0
    %742 = vmatprep.subr.mxu0 0.0
    %743 = vmatpush1.msra.mxu0 0.0
    %744 = vmatprep.mubr.f32.mxu0 0.0
    %745 = vmatmul.mubr.f32.gmra.mrb[0].mxu0 %v673
    %v746 = vpop.f32.mrb[0].mxu0
    %v747 = vadd.f32 %v678, %v746
    %v748 = vpop.f32.mrb[0].mxu0
    %749 = vdwg.mxu0
    %750 = vst [vmem:[#allocation2] sm:$0xf] %v747
    // Predicated region
    $region30: #{tpu_custom_call.1} parent=1 // pred_check
      _
    $region31: #{tpu_custom_call.1} parent=1 // pred_check_branch
      %752 = sbr.rel (0) target = $region33
    $region32: #{tpu_custom_call.1} parent=1 // pred_region
      %s754 = ssub.s32 64, 64
      %755 = vsyncadd [#allocation3], %s754
      %s757 = sshll.u32 [#allocation2], 4
      %s758 = int_to_ptr.vmem [resolvable:$true] %s757
      %760 = dma.vmem_to_hbm [thread:$0]  %s758, 64, %s7, [#allocation3]
    $region33: #{tpu_custom_call.1} parent=1 // pred_fallthru
      _
    // Predicated region
    $region34: #{tpu_custom_call.1} parent=1 // pred_check
      _
    $region35: #{tpu_custom_call.1} parent=1 // pred_check_branch
      %762 = sbr.rel (0) target = $region37
    $region36: #{tpu_custom_call.1} parent=1 // pred_region
      %763 = dma.done [#allocation3], 64
    $region37: #{tpu_custom_call.1} parent=1 // pred_fallthru
      _
    %764 = vsyncpa [#allocation3], 1

</llo_original>
